<compile_context>
chip_gen: v5e
topology: v5e:2x2
jax: 0.10.0
libtpu: 0.0.40
codegen_flags: <defaults>
</compile_context>

<pallas_src>
import jax
import jax.numpy as jnp
import numpy as np
from jax.experimental import pallas as pl
from jax.experimental.pallas import tpu as pltpu

IN_DIM = 2     # input features of mog_netD
HID = 256      # hidden width
OUT = 1        # final logit width
N_MID = 5      # five Linear(256,256) layers in `main`; Tanh after the first four
BATCH = 8

# Row layout of the packed "small parameters" slab, shape (N_SMALL, HID) f32.
_ROW_W0 = 0            # rows 0..1 : w0 (Linear(2,256) weight, (in,out) layout)
_ROW_B0 = 2            # row  2    : b0
_ROW_BMID = 3          # rows 3..7 : bmid[0..4]
_ROW_WF = 3 + N_MID    # row  8    : wf (Linear(256,1) weight, transposed)
_ROW_BF = 4 + N_MID    # row  9    : [bf, 0, 0, ...]
N_SMALL = 5 + N_MID    # 10 rows


def mog_netd_kernel(x_ref, wmid_ref, small_ref, out_main_ref, out_final_ref):
    """Whole forward pass in one invocation; all layers statically unrolled."""
    x = x_ref[...]                                        # (B, 2) f32

    # Layer 0: Linear(2, 256) + Tanh.  K=2 is degenerate for the MXU, so do it
    # as two VPU FMAs instead of a matmul.
    w0a = small_ref[_ROW_W0:_ROW_W0 + 1, :]               # (1, 256)
    w0b = small_ref[_ROW_W0 + 1:_ROW_W0 + 2, :]           # (1, 256)
    b0 = small_ref[_ROW_B0:_ROW_B0 + 1, :]                # (1, 256)
    z = x[:, 0:1] * w0a + x[:, 1:2] * w0b + b0            # (B, 256) f32
    h = jnp.tanh(z).astype(jnp.bfloat16)                  # bf16 MXU feed

    # Five Linear(256,256) layers; Tanh after the first four (inside `main`).
    # Weights are f32 in VMEM and cast to bf16 at the MXU feed; accumulate f32.
    for l in range(N_MID):
        b = small_ref[_ROW_BMID + l:_ROW_BMID + l + 1, :]  # (1, 256)
        z = jnp.dot(h, wmid_ref[l].astype(jnp.bfloat16),
                    preferred_element_type=jnp.float32) + b
        if l < N_MID - 1:
            h = jnp.tanh(z).astype(jnp.bfloat16)

    # `z` is now the output of `main` (no activation after the last mid layer).
    out_main_ref[...] = z

    # `final` = Tanh -> Linear(256, 1): VPU multiply + XLU lane reduction
    # (avoids a degenerate N=1 MXU matmul).
    wf = small_ref[_ROW_WF:_ROW_WF + 1, :]                # (1, 256)
    bf = small_ref[_ROW_BF:_ROW_BF + 1, 0:1]              # (1, 1)
    t = jnp.tanh(z)
    out_final_ref[...] = jnp.sum(t * wf, axis=-1, keepdims=True) + bf


def mog_netd_forward(x, params):
    """x: (B, 2) f32. Returns (main(x), final(main(x))) like the PyTorch module."""
    w0, b0, wmid, bmid, wf, bf = params
    B = x.shape[0]

    # Pad the batch to a sublane multiple (8) so (B, 256) blocks are tile-aligned.
    Bp = int(np.ceil(B / 8) * 8)
    if Bp != B:
        x = jnp.pad(x, ((0, Bp - B), (0, 0)))

    # Pack all small parameters into one (10, 256) f32 slab (fewer DMA streams).
    bf_row = jnp.zeros((1, HID), jnp.float32).at[0, 0].set(bf)
    small = jnp.concatenate(
        [w0,                          # (2, 256)
         b0.reshape(1, HID),          # (1, 256)
         bmid.reshape(N_MID, HID),    # (5, 256)
         wf.reshape(1, HID),          # (1, 256)
         bf_row],                     # (1, 256)
        axis=0)                       # -> (10, 256)

    out_main, out_final = pl.pallas_call(
        mog_netd_kernel,
        out_shape=(jax.ShapeDtypeStruct((Bp, HID), jnp.float32),   # output of `main`
                   jax.ShapeDtypeStruct((Bp, OUT), jnp.float32)),  # output of `final`
        in_specs=[
            pl.BlockSpec(memory_space=pltpu.MemorySpace.VMEM),     # x      (B, 2)
            pl.BlockSpec(memory_space=pltpu.MemorySpace.VMEM),     # wmid   (5, 256, 256)
            pl.BlockSpec(memory_space=pltpu.MemorySpace.VMEM),     # small  (10, 256)
        ],
        out_specs=(pl.BlockSpec(memory_space=pltpu.MemorySpace.VMEM),
                   pl.BlockSpec(memory_space=pltpu.MemorySpace.VMEM)),
    )(x, wmid, small)

    if Bp != B:
        out_main, out_final = out_main[:B], out_final[:B]
    return out_main, out_final


def init_params(key):
    """PyTorch nn.Linear default init: U(-1/sqrt(fan_in), 1/sqrt(fan_in)), all f32.

    Weights are stored pre-transposed as (in_features, out_features) so the
    kernel does plain row-major matmuls (y = x @ W + b == PyTorch x @ W^T + b).
    """
    ks = jax.random.split(key, 6)

    def unif(k, shape, fan_in):
        bound = 1.0 / np.sqrt(fan_in)
        return jax.random.uniform(k, shape, jnp.float32, -bound, bound)

    w0 = unif(ks[0], (IN_DIM, HID), IN_DIM)        # Linear(2,256)
    b0 = unif(ks[1], (HID,), IN_DIM)
    wmid = unif(ks[2], (N_MID, HID, HID), HID)     # 5 x Linear(256,256)
    bmid = unif(ks[3], (N_MID, HID), HID)
    wf = unif(ks[4], (HID,), HID)                  # Linear(256,1) weight (transposed)
    bf = unif(ks[5], (), HID)
    return w0, b0, wmid, bmid, wf, bf


def reference_forward(x, params):
    """Pure-JAX, PyTorch-faithful f32 reference (full-precision matmuls)."""
    w0, b0, wmid, bmid, wf, bf = params
    hp = jax.lax.Precision.HIGHEST
    h = jnp.tanh(jnp.dot(x, w0, precision=hp) + b0)
    for i in range(N_MID - 1):
        h = jnp.tanh(jnp.dot(h, wmid[i], precision=hp) + bmid[i])
    out_main = jnp.dot(h, wmid[N_MID - 1], precision=hp) + bmid[N_MID - 1]
    out_final = jnp.dot(jnp.tanh(out_main), wf[:, None], precision=hp) + bf
    return out_main, out_final


if __name__ == "__main__":
    key = jax.random.PRNGKey(0)
    k_x, k_p = jax.random.split(key)
    x = jax.random.normal(k_x, (BATCH, IN_DIM), jnp.float32)
    params = init_params(k_p)

    out_main, out_final = mog_netd_forward(x, params)
    out_main = jax.block_until_ready(out_main)
    out_final = jax.block_until_ready(out_final)

    ref_main, ref_final = reference_forward(x, params)
    ref_main = jax.block_until_ready(ref_main)
    ref_final = jax.block_until_ready(ref_final)

    assert out_main.shape == (BATCH, HID), out_main.shape
    assert out_final.shape == (BATCH, OUT), out_final.shape
    # Kernel feeds the MXU with bf16 operands (f32 accumulation); the reference
    # is full f32, so allow ~1e-2 (observed deviation is ~1e-3).
    np.testing.assert_allclose(np.asarray(out_main), np.asarray(ref_main),
                               rtol=1e-2, atol=1e-2)
    np.testing.assert_allclose(np.asarray(out_final), np.asarray(ref_final),
                               rtol=1e-2, atol=1e-2)
    print("KERNEL_OK")
</pallas_src>

<mosaic_0001>
module attributes {stable_mosaic.version = 11 : i64} {
  func.func @mog_netd_kernel(%arg0: memref<8x2xf32, #tpu.memory_space<vmem>>, %arg1: memref<5x256x256xf32, #tpu.memory_space<vmem>>, %arg2: memref<10x256xf32, #tpu.memory_space<vmem>>, %arg3: memref<8x256xf32, #tpu.memory_space<vmem>>, %arg4: memref<8x1xf32, #tpu.memory_space<vmem>>) attributes {dimension_semantics = [], scalar_prefetch = 0 : i64, scratch_operands = 0 : i64, tpu.core_type = #tpu.core_type<tc>} {
    %c0 = arith.constant 0 : index
    %c0_0 = arith.constant 0 : index
    %0 = vector.load %arg0[%c0, %c0_0] : memref<8x2xf32, #tpu.memory_space<vmem>>, vector<8x2xf32>
    %c0_1 = arith.constant 0 : index
    %c0_2 = arith.constant 0 : index
    %1 = vector.load %arg2[%c0_1, %c0_2] : memref<10x256xf32, #tpu.memory_space<vmem>>, vector<1x256xf32>
    %c1 = arith.constant 1 : index
    %c0_3 = arith.constant 0 : index
    %2 = vector.load %arg2[%c1, %c0_3] : memref<10x256xf32, #tpu.memory_space<vmem>>, vector<1x256xf32>
    %c2 = arith.constant 2 : index
    %c0_4 = arith.constant 0 : index
    %3 = vector.load %arg2[%c2, %c0_4] : memref<10x256xf32, #tpu.memory_space<vmem>>, vector<1x256xf32>
    %4 = vector.extract_strided_slice %0 {offsets = [0, 0], sizes = [8, 1], strides = [1, 1]} : vector<8x2xf32> to vector<8x1xf32>
    %5 = vector.broadcast %4 : vector<8x1xf32> to vector<8x256xf32>
    %6 = vector.broadcast %1 : vector<1x256xf32> to vector<8x256xf32>
    %7 = arith.mulf %5, %6 : vector<8x256xf32>
    %8 = vector.extract_strided_slice %0 {offsets = [0, 1], sizes = [8, 1], strides = [1, 1]} : vector<8x2xf32> to vector<8x1xf32>
    %9 = vector.broadcast %8 : vector<8x1xf32> to vector<8x256xf32>
    %10 = vector.broadcast %2 : vector<1x256xf32> to vector<8x256xf32>
    %11 = arith.mulf %9, %10 : vector<8x256xf32>
    %12 = arith.addf %7, %11 : vector<8x256xf32>
    %13 = vector.broadcast %3 : vector<1x256xf32> to vector<8x256xf32>
    %14 = arith.addf %12, %13 : vector<8x256xf32>
    %15 = math.tanh %14 : vector<8x256xf32>
    %16 = arith.truncf %15 : vector<8x256xf32> to vector<8x256xbf16>
    %c3 = arith.constant 3 : index
    %c0_5 = arith.constant 0 : index
    %17 = vector.load %arg2[%c3, %c0_5] : memref<10x256xf32, #tpu.memory_space<vmem>>, vector<1x256xf32>
    %c0_6 = arith.constant 0 : index
    %c0_7 = arith.constant 0 : index
    %c0_8 = arith.constant 0 : index
    %18 = vector.load %arg1[%c0_6, %c0_7, %c0_8] : memref<5x256x256xf32, #tpu.memory_space<vmem>>, vector<1x256x256xf32>
    %19 = vector.shape_cast %18 : vector<1x256x256xf32> to vector<256x256xf32>
    %20 = arith.truncf %19 : vector<256x256xf32> to vector<256x256xbf16>
    %cst = arith.constant dense<0.000000e+00> : vector<8x256xf32>
    %21 = tpu.matmul %16, %20, %cst {dimension_numbers = #tpu.dot_dimension_numbers<[1], [0], [0], [1], [0, 0, 1, 1], [], []>} : vector<8x256xbf16>, vector<256x256xbf16>, vector<8x256xf32> -> vector<8x256xf32>
    %22 = vector.broadcast %17 : vector<1x256xf32> to vector<8x256xf32>
    %23 = arith.addf %21, %22 : vector<8x256xf32>
    %24 = math.tanh %23 : vector<8x256xf32>
    %25 = arith.truncf %24 : vector<8x256xf32> to vector<8x256xbf16>
    %c4 = arith.constant 4 : index
    %c0_9 = arith.constant 0 : index
    %26 = vector.load %arg2[%c4, %c0_9] : memref<10x256xf32, #tpu.memory_space<vmem>>, vector<1x256xf32>
    %c1_10 = arith.constant 1 : index
    %c0_11 = arith.constant 0 : index
    %c0_12 = arith.constant 0 : index
    %27 = vector.load %arg1[%c1_10, %c0_11, %c0_12] : memref<5x256x256xf32, #tpu.memory_space<vmem>>, vector<1x256x256xf32>
    %28 = vector.shape_cast %27 : vector<1x256x256xf32> to vector<256x256xf32>
    %29 = arith.truncf %28 : vector<256x256xf32> to vector<256x256xbf16>
    %cst_13 = arith.constant dense<0.000000e+00> : vector<8x256xf32>
    %30 = tpu.matmul %25, %29, %cst_13 {dimension_numbers = #tpu.dot_dimension_numbers<[1], [0], [0], [1], [0, 0, 1, 1], [], []>} : vector<8x256xbf16>, vector<256x256xbf16>, vector<8x256xf32> -> vector<8x256xf32>
    %31 = vector.broadcast %26 : vector<1x256xf32> to vector<8x256xf32>
    %32 = arith.addf %30, %31 : vector<8x256xf32>
    %33 = math.tanh %32 : vector<8x256xf32>
    %34 = arith.truncf %33 : vector<8x256xf32> to vector<8x256xbf16>
    %c5 = arith.constant 5 : index
    %c0_14 = arith.constant 0 : index
    %35 = vector.load %arg2[%c5, %c0_14] : memref<10x256xf32, #tpu.memory_space<vmem>>, vector<1x256xf32>
    %c2_15 = arith.constant 2 : index
    %c0_16 = arith.constant 0 : index
    %c0_17 = arith.constant 0 : index
    %36 = vector.load %arg1[%c2_15, %c0_16, %c0_17] : memref<5x256x256xf32, #tpu.memory_space<vmem>>, vector<1x256x256xf32>
    %37 = vector.shape_cast %36 : vector<1x256x256xf32> to vector<256x256xf32>
    %38 = arith.truncf %37 : vector<256x256xf32> to vector<256x256xbf16>
    %cst_18 = arith.constant dense<0.000000e+00> : vector<8x256xf32>
    %39 = tpu.matmul %34, %38, %cst_18 {dimension_numbers = #tpu.dot_dimension_numbers<[1], [0], [0], [1], [0, 0, 1, 1], [], []>} : vector<8x256xbf16>, vector<256x256xbf16>, vector<8x256xf32> -> vector<8x256xf32>
    %40 = vector.broadcast %35 : vector<1x256xf32> to vector<8x256xf32>
    %41 = arith.addf %39, %40 : vector<8x256xf32>
    %42 = math.tanh %41 : vector<8x256xf32>
    %43 = arith.truncf %42 : vector<8x256xf32> to vector<8x256xbf16>
    %c6 = arith.constant 6 : index
    %c0_19 = arith.constant 0 : index
    %44 = vector.load %arg2[%c6, %c0_19] : memref<10x256xf32, #tpu.memory_space<vmem>>, vector<1x256xf32>
    %c3_20 = arith.constant 3 : index
    %c0_21 = arith.constant 0 : index
    %c0_22 = arith.constant 0 : index
    %45 = vector.load %arg1[%c3_20, %c0_21, %c0_22] : memref<5x256x256xf32, #tpu.memory_space<vmem>>, vector<1x256x256xf32>
    %46 = vector.shape_cast %45 : vector<1x256x256xf32> to vector<256x256xf32>
    %47 = arith.truncf %46 : vector<256x256xf32> to vector<256x256xbf16>
    %cst_23 = arith.constant dense<0.000000e+00> : vector<8x256xf32>
    %48 = tpu.matmul %43, %47, %cst_23 {dimension_numbers = #tpu.dot_dimension_numbers<[1], [0], [0], [1], [0, 0, 1, 1], [], []>} : vector<8x256xbf16>, vector<256x256xbf16>, vector<8x256xf32> -> vector<8x256xf32>
    %49 = vector.broadcast %44 : vector<1x256xf32> to vector<8x256xf32>
    %50 = arith.addf %48, %49 : vector<8x256xf32>
    %51 = math.tanh %50 : vector<8x256xf32>
    %52 = arith.truncf %51 : vector<8x256xf32> to vector<8x256xbf16>
    %c7 = arith.constant 7 : index
    %c0_24 = arith.constant 0 : index
    %53 = vector.load %arg2[%c7, %c0_24] : memref<10x256xf32, #tpu.memory_space<vmem>>, vector<1x256xf32>
    %c4_25 = arith.constant 4 : index
    %c0_26 = arith.constant 0 : index
    %c0_27 = arith.constant 0 : index
    %54 = vector.load %arg1[%c4_25, %c0_26, %c0_27] : memref<5x256x256xf32, #tpu.memory_space<vmem>>, vector<1x256x256xf32>
    %55 = vector.shape_cast %54 : vector<1x256x256xf32> to vector<256x256xf32>
    %56 = arith.truncf %55 : vector<256x256xf32> to vector<256x256xbf16>
    %cst_28 = arith.constant dense<0.000000e+00> : vector<8x256xf32>
    %57 = tpu.matmul %52, %56, %cst_28 {dimension_numbers = #tpu.dot_dimension_numbers<[1], [0], [0], [1], [0, 0, 1, 1], [], []>} : vector<8x256xbf16>, vector<256x256xbf16>, vector<8x256xf32> -> vector<8x256xf32>
    %58 = vector.broadcast %53 : vector<1x256xf32> to vector<8x256xf32>
    %59 = arith.addf %57, %58 : vector<8x256xf32>
    %c0_29 = arith.constant 0 : index
    %c0_30 = arith.constant 0 : index
    %60 = vector.load %arg3[%c0_29, %c0_30] : memref<8x256xf32, #tpu.memory_space<vmem>>, vector<8x256xf32>
    tpu.vector_store %arg3[%c0_29, %c0_30], %59 {strides = array<i32>} : memref<8x256xf32, #tpu.memory_space<vmem>>, vector<8x256xf32>,
    %c8 = arith.constant 8 : index
    %c0_31 = arith.constant 0 : index
    %61 = vector.load %arg2[%c8, %c0_31] : memref<10x256xf32, #tpu.memory_space<vmem>>, vector<1x256xf32>
    %c9 = arith.constant 9 : index
    %c0_32 = arith.constant 0 : index
    %62 = vector.load %arg2[%c9, %c0_32] : memref<10x256xf32, #tpu.memory_space<vmem>>, vector<1x1xf32>
    %63 = math.tanh %59 : vector<8x256xf32>
    %64 = vector.broadcast %61 : vector<1x256xf32> to vector<8x256xf32>
    %65 = arith.mulf %63, %64 : vector<8x256xf32>
    %cst_33 = arith.constant dense<0.000000e+00> : vector<8xf32>
    %66 = vector.multi_reduction <add>, %65, %cst_33 [1] : vector<8x256xf32> to vector<8xf32>
    %67 = vector.shape_cast %66 : vector<8xf32> to vector<8x1xf32>
    %68 = vector.broadcast %62 : vector<1x1xf32> to vector<8x1xf32>
    %69 = arith.addf %67, %68 : vector<8x1xf32>
    %c0_34 = arith.constant 0 : index
    %c0_35 = arith.constant 0 : index
    %70 = vector.load %arg4[%c0_34, %c0_35] : memref<8x1xf32, #tpu.memory_space<vmem>>, vector<8x1xf32>
    tpu.vector_store %arg4[%c0_34, %c0_35], %69 {strides = array<i32>} : memref<8x1xf32, #tpu.memory_space<vmem>>, vector<8x1xf32>,
    return
  }
}

</mosaic_0001>

<llo_original>
// kernel: tpu_custom_call.1
$region0: #{tpu_custom_call.1}
  #allocation0 [shape = 'u32[]', space=smem, size = 0x4, offset = 0x4, fixed_abs, tag = 'smem constant byte address 0x4 - core index']
  #allocation1 [shape = 'u32[72,128]{1,0:T(1,128)}', space=vmem, size = 0x9000, scoped, tag = 'internal scratch']
  %s0 = inlined_call_operand.vmem [shape: f32[8,2], index: 0, kind: input, shape index: {}]
  %s1 = inlined_call_operand.hbm [shape: f32[5,256,256], index: 1, kind: input, shape index: {}]
  %s2 = inlined_call_operand.hbm [shape: f32[10,256], index: 2, kind: input, shape index: {}]
  %s3 = inlined_call_operand.hbm [shape: f32[8,256], index: 3, kind: output, shape index: {0}]
  %s4 = inlined_call_operand.vmem [shape: f32[8,1], index: 4, kind: output, shape index: {1}]
  %5 = xla_tuple %s3, %s4
  %s6 = sld [smem:[#allocation0]]
  $region38: #{tpu_custom_call.1} parent=0
    _
  %s8 = ssub.s32 1, %s6
  %s9 = scalar_select 0, %s8, %s6
  $region1: #{tpu_custom_call.1} parent=0
    #allocation2 [shape = 'u8[1310720]{0}', space=vmem, size = 0x140000, scoped, tag = 'input window, operand 1, single buffered']
    #allocation3 [shape = 's32[1]{0}', space=sflag, size = 0x4, scoped, tag = 'scoped memory for tpu_custom_call.1']
    #allocation4 [shape = 's32[1]{0}', space=sflag, size = 0x4, scoped, tag = 'scoped memory for tpu_custom_call.1']
    #allocation5 [shape = 'u8[16384]{0}', space=vmem, size = 0x4000, scoped, tag = 'input window, operand 2, single buffered']
    #allocation6 [shape = 's32[1]{0}', space=sflag, size = 0x4, scoped, tag = 'scoped memory for tpu_custom_call.1']
    #allocation7 [shape = 'u8[8192]{0}', space=vmem, size = 0x2000, scoped, tag = 'output window, operand 0, single buffered']
    %10 = vsyncpa [#allocation3], 0
    %11 = vsyncpa [#allocation6], 0
    %12 = vsyncpa [#allocation4], 0
    // Predicated region
    $region2: #{tpu_custom_call.1} parent=1 // pred_check
      _
    $region3: #{tpu_custom_call.1} parent=1 // pred_check_branch
      %14 = sbr.rel (0) target = $region5
    $region4: #{tpu_custom_call.1} parent=1 // pred_region
      _
    $region5: #{tpu_custom_call.1} parent=1 // pred_fallthru
      _
    // Predicated region
    $region6: #{tpu_custom_call.1} parent=1 // pred_check
      _
    $region7: #{tpu_custom_call.1} parent=1 // pred_check_branch
      %16 = sbr.rel (0) target = $region9
    $region8: #{tpu_custom_call.1} parent=1 // pred_region
      %18 = vsyncadd [#allocation3], 0
      %s19 = sshll.u32 %s1, 4
      %s20 = int_to_ptr.hbm [resolvable:$true] %s19
      %s21 = sshll.u32 [#allocation2], 4
      %s22 = int_to_ptr.vmem [resolvable:$true] %s21
      %27 = dma.hbm_to_vmem [thread:$0]  %s20, 40960, %s22, [#allocation3], 256, 256, 16
    $region9: #{tpu_custom_call.1} parent=1 // pred_fallthru
      _
    // Predicated region
    $region10: #{tpu_custom_call.1} parent=1 // pred_check
      _
    $region11: #{tpu_custom_call.1} parent=1 // pred_check_branch
      %29 = sbr.rel (0) target = $region13
    $region12: #{tpu_custom_call.1} parent=1 // pred_region
      %31 = vsyncadd [#allocation6], 0
      %s32 = sshll.u32 %s2, 4
      %s33 = int_to_ptr.hbm [resolvable:$true] %s32
      %s34 = sshll.u32 [#allocation5], 4
      %s35 = int_to_ptr.vmem [resolvable:$true] %s34
      %40 = dma.hbm_to_vmem [thread:$0]  %s33, 512, %s35, [#allocation6], 256, 256, 16
    $region13: #{tpu_custom_call.1} parent=1 // pred_fallthru
      _
    // Predicated region
    $region14: #{tpu_custom_call.1} parent=1 // pred_check
      _
    $region15: #{tpu_custom_call.1} parent=1 // pred_check_branch
      %42 = sbr.rel (0) target = $region17
    $region16: #{tpu_custom_call.1} parent=1 // pred_region
      %44 = dma.done [#allocation3], 40960
    $region17: #{tpu_custom_call.1} parent=1 // pred_fallthru
      _
    // Predicated region
    $region18: #{tpu_custom_call.1} parent=1 // pred_check
      _
    $region19: #{tpu_custom_call.1} parent=1 // pred_check_branch
      %46 = sbr.rel (0) target = $region21
    $region20: #{tpu_custom_call.1} parent=1 // pred_region
      %48 = dma.done [#allocation6], 512
    $region21: #{tpu_custom_call.1} parent=1 // pred_fallthru
      _
    %v49 = vld [vmem:[%s0] sm:$0xff]
    %v50 = vld [vmem:[#allocation5] ss:$8 sm:$0x3]
    %s51 = scalar_lea.vmem [#allocation5], 1
    %v52 = vld [vmem:[%s51] ss:$8 sm:$0x3]
    %s53 = scalar_lea.vmem [#allocation5], 2
    %v54 = vld [vmem:[%s53] ss:$8 sm:$0x3]
    %56 = vset.pattern.permute.xlu0 0
    %57 = vperm.xlu0 %56, %v49
    %v58 = vpop.permute.xlu0 %57
    %v61 = vperm.slane %v50, 0
    %v62 = vperm.slane %v50, 1
    %v65 = vmul.f32 %v58, %v61
    %v66 = vmul.f32 %v58, %v62
    %67 = vset.pattern.permute.xlu0 1
    %68 = vperm.xlu0 %67, %v49
    %v69 = vpop.permute.xlu0 %68
    %v72 = vperm.slane %v52, 0
    %v73 = vperm.slane %v52, 1
    %v76 = vmul.f32 %v69, %v72
    %v77 = vmul.f32 %v69, %v73
    %v78 = vadd.f32 %v65, %v76
    %v79 = vadd.f32 %v66, %v77
    %v81 = vperm.slane %v54, 0
    %v82 = vperm.slane %v54, 1
    %v85 = vadd.f32 %v78, %v81
    %v86 = vadd.f32 %v79, %v82
    %v87 = vtanh.pop %v85
    %v88 = vtanh.pop %v86
    %v89 = vpack.c.bf16 %v87, %v87
    %v90 = vpack.c.bf16 %v88, %v88
    %s91 = scalar_lea.vmem [#allocation5], 3
    %v92 = vld [vmem:[%s91] ss:$8 sm:$0x3]
    %v93 = vld [vmem:[#allocation2] sm:$0xff]
    %v94 = vld [vmem:[#allocation2 + $0x8] sm:$0xff]
    %v95 = vld [vmem:[#allocation2 + $0x10] sm:$0xff]
    %v96 = vld [vmem:[#allocation2 + $0x18] sm:$0xff]
    %v97 = vld [vmem:[#allocation2 + $0x20] sm:$0xff]
    %v98 = vld [vmem:[#allocation2 + $0x28] sm:$0xff]
    %v99 = vld [vmem:[#allocation2 + $0x30] sm:$0xff]
    %v100 = vld [vmem:[#allocation2 + $0x38] sm:$0xff]
    %v101 = vld [vmem:[#allocation2 + $0x40] sm:$0xff]
    %v102 = vld [vmem:[#allocation2 + $0x48] sm:$0xff]
    %v103 = vld [vmem:[#allocation2 + $0x50] sm:$0xff]
    %v104 = vld [vmem:[#allocation2 + $0x58] sm:$0xff]
    %v105 = vld [vmem:[#allocation2 + $0x60] sm:$0xff]
    %v106 = vld [vmem:[#allocation2 + $0x68] sm:$0xff]
    %v107 = vld [vmem:[#allocation2 + $0x70] sm:$0xff]
    %v108 = vld [vmem:[#allocation2 + $0x78] sm:$0xff]
    %v109 = vld [vmem:[#allocation2 + $0x80] sm:$0xff]
    %v110 = vld [vmem:[#allocation2 + $0x88] sm:$0xff]
    %v111 = vld [vmem:[#allocation2 + $0x90] sm:$0xff]
    %v112 = vld [vmem:[#allocation2 + $0x98] sm:$0xff]
    %v113 = vld [vmem:[#allocation2 + $0xa0] sm:$0xff]
    %v114 = vld [vmem:[#allocation2 + $0xa8] sm:$0xff]
    %v115 = vld [vmem:[#allocation2 + $0xb0] sm:$0xff]
    %v116 = vld [vmem:[#allocation2 + $0xb8] sm:$0xff]
    %v117 = vld [vmem:[#allocation2 + $0xc0] sm:$0xff]
    %v118 = vld [vmem:[#allocation2 + $0xc8] sm:$0xff]
    %v119 = vld [vmem:[#allocation2 + $0xd0] sm:$0xff]
    %v120 = vld [vmem:[#allocation2 + $0xd8] sm:$0xff]
    %v121 = vld [vmem:[#allocation2 + $0xe0] sm:$0xff]
    %v122 = vld [vmem:[#allocation2 + $0xe8] sm:$0xff]
    %v123 = vld [vmem:[#allocation2 + $0xf0] sm:$0xff]
    %v124 = vld [vmem:[#allocation2 + $0xf8] sm:$0xff]
    %v125 = vld [vmem:[#allocation2 + $0x100] sm:$0xff]
    %v126 = vld [vmem:[#allocation2 + $0x108] sm:$0xff]
    %v127 = vld [vmem:[#allocation2 + $0x110] sm:$0xff]
    %v128 = vld [vmem:[#allocation2 + $0x118] sm:$0xff]
    %v129 = vld [vmem:[#allocation2 + $0x120] sm:$0xff]
    %v130 = vld [vmem:[#allocation2 + $0x128] sm:$0xff]
    %v131 = vld [vmem:[#allocation2 + $0x130] sm:$0xff]
    %v132 = vld [vmem:[#allocation2 + $0x138] sm:$0xff]
    %v133 = vld [vmem:[#allocation2 + $0x140] sm:$0xff]
    %v134 = vld [vmem:[#allocation2 + $0x148] sm:$0xff]
    %v135 = vld [vmem:[#allocation2 + $0x150] sm:$0xff]
    %v136 = vld [vmem:[#allocation2 + $0x158] sm:$0xff]
    %v137 = vld [vmem:[#allocation2 + $0x160] sm:$0xff]
    %v138 = vld [vmem:[#allocation2 + $0x168] sm:$0xff]
    %v139 = vld [vmem:[#allocation2 + $0x170] sm:$0xff]
    %v140 = vld [vmem:[#allocation2 + $0x178] sm:$0xff]
    %v141 = vld [vmem:[#allocation2 + $0x180] sm:$0xff]
    %v142 = vld [vmem:[#allocation2 + $0x188] sm:$0xff]
    %v143 = vld [vmem:[#allocation2 + $0x190] sm:$0xff]
    %v144 = vld [vmem:[#allocation2 + $0x198] sm:$0xff]
    %v145 = vld [vmem:[#allocation2 + $0x1a0] sm:$0xff]
    %v146 = vld [vmem:[#allocation2 + $0x1a8] sm:$0xff]
    %v147 = vld [vmem:[#allocation2 + $0x1b0] sm:$0xff]
    %v148 = vld [vmem:[#allocation2 + $0x1b8] sm:$0xff]
    %v149 = vld [vmem:[#allocation2 + $0x1c0] sm:$0xff]
    %v150 = vld [vmem:[#allocation2 + $0x1c8] sm:$0xff]
    %v151 = vld [vmem:[#allocation2 + $0x1d0] sm:$0xff]
    %v152 = vld [vmem:[#allocation2 + $0x1d8] sm:$0xff]
    %v153 = vld [vmem:[#allocation2 + $0x1e0] sm:$0xff]
    %v154 = vld [vmem:[#allocation2 + $0x1e8] sm:$0xff]
    %v155 = vld [vmem:[#allocation2 + $0x1f0] sm:$0xff]
    %v156 = vld [vmem:[#allocation2 + $0x1f8] sm:$0xff]
    %v157 = vpack.c.bf16 %v95, %v93
    %v158 = vpack.c.bf16 %v96, %v94
    %v159 = vpack.c.bf16 %v99, %v97
    %v160 = vpack.c.bf16 %v100, %v98
    %v161 = vpack.c.bf16 %v103, %v101
    %v162 = vpack.c.bf16 %v104, %v102
    %v163 = vpack.c.bf16 %v107, %v105
    %v164 = vpack.c.bf16 %v108, %v106
    %v165 = vpack.c.bf16 %v111, %v109
    %v166 = vpack.c.bf16 %v112, %v110
    %v167 = vpack.c.bf16 %v115, %v113
    %v168 = vpack.c.bf16 %v116, %v114
    %v169 = vpack.c.bf16 %v119, %v117
    %v170 = vpack.c.bf16 %v120, %v118
    %v171 = vpack.c.bf16 %v123, %v121
    %v172 = vpack.c.bf16 %v124, %v122
    %v173 = vpack.c.bf16 %v127, %v125
    %v174 = vpack.c.bf16 %v128, %v126
    %v175 = vpack.c.bf16 %v131, %v129
    %v176 = vpack.c.bf16 %v132, %v130
    %v177 = vpack.c.bf16 %v135, %v133
    %v178 = vpack.c.bf16 %v136, %v134
    %v179 = vpack.c.bf16 %v139, %v137
    %v180 = vpack.c.bf16 %v140, %v138
    %v181 = vpack.c.bf16 %v143, %v141
    %v182 = vpack.c.bf16 %v144, %v142
    %v183 = vpack.c.bf16 %v147, %v145
    %v184 = vpack.c.bf16 %v148, %v146
    %v185 = vpack.c.bf16 %v151, %v149
    %v186 = vpack.c.bf16 %v152, %v150
    %v187 = vpack.c.bf16 %v155, %v153
    %v188 = vpack.c.bf16 %v156, %v154
    %v190 = vperm.slane %v92, 0
    %v191 = vperm.slane %v92, 1
    %194 = vmatpush.bf16.msra.mxu0 %v171
    %195 = vmatpush.bf16.msra.mxu0 %v169
    %196 = vmatpush.bf16.msra.mxu0 %v167
    %197 = vmatpush.bf16.msra.mxu0 %v165
    %198 = vmatpush.bf16.msra.mxu0 %v163
    %199 = vmatpush.bf16.msra.mxu0 %v161
    %200 = vmatpush.bf16.msra.mxu0 %v159
    %201 = vmatpush.bf16.msra.mxu0 %v157
    %202 = vmatmul.bf16.gmra.mxu0 %v89
    %v203 = vpop.f32.mrf.mxu0
    %v204 = vadd.f32 %v190, %v203
    %v205 = vpop.f32.mrf.mxu0
    %206 = vdwg.mxu0
    %207 = vmatpush.bf16.msra.mxu0 %v187
    %208 = vmatpush.bf16.msra.mxu0 %v185
    %209 = vmatpush.bf16.msra.mxu0 %v183
    %210 = vmatpush.bf16.msra.mxu0 %v181
    %211 = vmatpush.bf16.msra.mxu0 %v179
    %212 = vmatpush.bf16.msra.mxu0 %v177
    %213 = vmatpush.bf16.msra.mxu0 %v175
    %214 = vmatpush.bf16.msra.mxu0 %v173
    %215 = vmatmul.bf16.gmra.mxu0 %v90
    %v216 = vpop.f32.mrf.mxu0
    %v217 = vadd.f32 %v204, %v216
    %v218 = vpop.f32.mrf.mxu0
    %219 = vdwg.mxu0
    %220 = vmatpush.bf16.msra.mxu0 %v172
    %221 = vmatpush.bf16.msra.mxu0 %v170
    %222 = vmatpush.bf16.msra.mxu0 %v168
    %223 = vmatpush.bf16.msra.mxu0 %v166
    %224 = vmatpush.bf16.msra.mxu0 %v164
    %225 = vmatpush.bf16.msra.mxu0 %v162
    %226 = vmatpush.bf16.msra.mxu0 %v160
    %227 = vmatpush.bf16.msra.mxu0 %v158
    %228 = vmatmul.bf16.gmra.mxu0 %v89
    %v229 = vpop.f32.mrf.mxu0
    %v230 = vadd.f32 %v191, %v229
    %v231 = vpop.f32.mrf.mxu0
    %232 = vdwg.mxu0
    %233 = vmatpush.bf16.msra.mxu0 %v188
    %234 = vmatpush.bf16.msra.mxu0 %v186
    %235 = vmatpush.bf16.msra.mxu0 %v184
    %236 = vmatpush.bf16.msra.mxu0 %v182
    %237 = vmatpush.bf16.msra.mxu0 %v180
    %238 = vmatpush.bf16.msra.mxu0 %v178
    %239 = vmatpush.bf16.msra.mxu0 %v176
    %240 = vmatpush.bf16.msra.mxu0 %v174
    %241 = vmatmul.bf16.gmra.mxu0 %v90
    %v242 = vpop.f32.mrf.mxu0
    %v243 = vadd.f32 %v230, %v242
    %v244 = vpop.f32.mrf.mxu0
    %245 = vdwg.mxu0
    %v246 = vtanh.pop %v217
    %v247 = vtanh.pop %v243
    %v248 = vpack.c.bf16 %v246, %v246
    %v249 = vpack.c.bf16 %v247, %v247
    %s250 = scalar_lea.vmem [#allocation5], 4
    %v251 = vld [vmem:[%s250] ss:$8 sm:$0x3]
    %s252 = scalar_lea.vmem [#allocation2], 512
    %v253 = vld [vmem:[%s252] sm:$0xff]
    %v254 = vld [vmem:[%s252 + $0x8] sm:$0xff]
    %v255 = vld [vmem:[%s252 + $0x10] sm:$0xff]
    %v256 = vld [vmem:[%s252 + $0x18] sm:$0xff]
    %v257 = vld [vmem:[%s252 + $0x20] sm:$0xff]
    %v258 = vld [vmem:[%s252 + $0x28] sm:$0xff]
    %v259 = vld [vmem:[%s252 + $0x30] sm:$0xff]
    %v260 = vld [vmem:[%s252 + $0x38] sm:$0xff]
    %v261 = vld [vmem:[%s252 + $0x40] sm:$0xff]
    %v262 = vld [vmem:[%s252 + $0x48] sm:$0xff]
    %v263 = vld [vmem:[%s252 + $0x50] sm:$0xff]
    %v264 = vld [vmem:[%s252 + $0x58] sm:$0xff]
    %v265 = vld [vmem:[%s252 + $0x60] sm:$0xff]
    %v266 = vld [vmem:[%s252 + $0x68] sm:$0xff]
    %v267 = vld [vmem:[%s252 + $0x70] sm:$0xff]
    %v268 = vld [vmem:[%s252 + $0x78] sm:$0xff]
    %v269 = vld [vmem:[%s252 + $0x80] sm:$0xff]
    %v270 = vld [vmem:[%s252 + $0x88] sm:$0xff]
    %v271 = vld [vmem:[%s252 + $0x90] sm:$0xff]
    %v272 = vld [vmem:[%s252 + $0x98] sm:$0xff]
    %v273 = vld [vmem:[%s252 + $0xa0] sm:$0xff]
    %v274 = vld [vmem:[%s252 + $0xa8] sm:$0xff]
    %v275 = vld [vmem:[%s252 + $0xb0] sm:$0xff]
    %v276 = vld [vmem:[%s252 + $0xb8] sm:$0xff]
    %v277 = vld [vmem:[%s252 + $0xc0] sm:$0xff]
    %v278 = vld [vmem:[%s252 + $0xc8] sm:$0xff]
    %v279 = vld [vmem:[%s252 + $0xd0] sm:$0xff]
    %v280 = vld [vmem:[%s252 + $0xd8] sm:$0xff]
    %v281 = vld [vmem:[%s252 + $0xe0] sm:$0xff]
    %v282 = vld [vmem:[%s252 + $0xe8] sm:$0xff]
    %v283 = vld [vmem:[%s252 + $0xf0] sm:$0xff]
    %v284 = vld [vmem:[%s252 + $0xf8] sm:$0xff]
    %v285 = vld [vmem:[%s252 + $0x100] sm:$0xff]
    %v286 = vld [vmem:[%s252 + $0x108] sm:$0xff]
    %v287 = vld [vmem:[%s252 + $0x110] sm:$0xff]
    %v288 = vld [vmem:[%s252 + $0x118] sm:$0xff]
    %v289 = vld [vmem:[%s252 + $0x120] sm:$0xff]
    %v290 = vld [vmem:[%s252 + $0x128] sm:$0xff]
    %v291 = vld [vmem:[%s252 + $0x130] sm:$0xff]
    %v292 = vld [vmem:[%s252 + $0x138] sm:$0xff]
    %v293 = vld [vmem:[%s252 + $0x140] sm:$0xff]
    %v294 = vld [vmem:[%s252 + $0x148] sm:$0xff]
    %v295 = vld [vmem:[%s252 + $0x150] sm:$0xff]
    %v296 = vld [vmem:[%s252 + $0x158] sm:$0xff]
    %v297 = vld [vmem:[%s252 + $0x160] sm:$0xff]
    %v298 = vld [vmem:[%s252 + $0x168] sm:$0xff]
    %v299 = vld [vmem:[%s252 + $0x170] sm:$0xff]
    %v300 = vld [vmem:[%s252 + $0x178] sm:$0xff]
    %v301 = vld [vmem:[%s252 + $0x180] sm:$0xff]
    %v302 = vld [vmem:[%s252 + $0x188] sm:$0xff]
    %v303 = vld [vmem:[%s252 + $0x190] sm:$0xff]
    %v304 = vld [vmem:[%s252 + $0x198] sm:$0xff]
    %v305 = vld [vmem:[%s252 + $0x1a0] sm:$0xff]
    %v306 = vld [vmem:[%s252 + $0x1a8] sm:$0xff]
    %v307 = vld [vmem:[%s252 + $0x1b0] sm:$0xff]
    %v308 = vld [vmem:[%s252 + $0x1b8] sm:$0xff]
    %v309 = vld [vmem:[%s252 + $0x1c0] sm:$0xff]
    %v310 = vld [vmem:[%s252 + $0x1c8] sm:$0xff]
    %v311 = vld [vmem:[%s252 + $0x1d0] sm:$0xff]
    %v312 = vld [vmem:[%s252 + $0x1d8] sm:$0xff]
    %v313 = vld [vmem:[%s252 + $0x1e0] sm:$0xff]
    %v314 = vld [vmem:[%s252 + $0x1e8] sm:$0xff]
    %v315 = vld [vmem:[%s252 + $0x1f0] sm:$0xff]
    %v316 = vld [vmem:[%s252 + $0x1f8] sm:$0xff]
    %v317 = vpack.c.bf16 %v255, %v253
    %v318 = vpack.c.bf16 %v256, %v254
    %v319 = vpack.c.bf16 %v259, %v257
    %v320 = vpack.c.bf16 %v260, %v258
    %v321 = vpack.c.bf16 %v263, %v261
    %v322 = vpack.c.bf16 %v264, %v262
    %v323 = vpack.c.bf16 %v267, %v265
    %v324 = vpack.c.bf16 %v268, %v266
    %v325 = vpack.c.bf16 %v271, %v269
    %v326 = vpack.c.bf16 %v272, %v270
    %v327 = vpack.c.bf16 %v275, %v273
    %v328 = vpack.c.bf16 %v276, %v274
    %v329 = vpack.c.bf16 %v279, %v277
    %v330 = vpack.c.bf16 %v280, %v278
    %v331 = vpack.c.bf16 %v283, %v281
    %v332 = vpack.c.bf16 %v284, %v282
    %v333 = vpack.c.bf16 %v287, %v285
    %v334 = vpack.c.bf16 %v288, %v286
    %v335 = vpack.c.bf16 %v291, %v289
    %v336 = vpack.c.bf16 %v292, %v290
    %v337 = vpack.c.bf16 %v295, %v293
    %v338 = vpack.c.bf16 %v296, %v294
    %v339 = vpack.c.bf16 %v299, %v297
    %v340 = vpack.c.bf16 %v300, %v298
    %v341 = vpack.c.bf16 %v303, %v301
    %v342 = vpack.c.bf16 %v304, %v302
    %v343 = vpack.c.bf16 %v307, %v305
    %v344 = vpack.c.bf16 %v308, %v306
    %v345 = vpack.c.bf16 %v311, %v309
    %v346 = vpack.c.bf16 %v312, %v310
    %v347 = vpack.c.bf16 %v315, %v313
    %v348 = vpack.c.bf16 %v316, %v314
    %v350 = vperm.slane %v251, 0
    %v351 = vperm.slane %v251, 1
    %354 = vmatpush.bf16.msra.mxu0 %v331
    %355 = vmatpush.bf16.msra.mxu0 %v329
    %356 = vmatpush.bf16.msra.mxu0 %v327
    %357 = vmatpush.bf16.msra.mxu0 %v325
    %358 = vmatpush.bf16.msra.mxu0 %v323
    %359 = vmatpush.bf16.msra.mxu0 %v321
    %360 = vmatpush.bf16.msra.mxu0 %v319
    %361 = vmatpush.bf16.msra.mxu0 %v317
    %362 = vmatmul.bf16.gmra.mxu0 %v248
    %v363 = vpop.f32.mrf.mxu0
    %v364 = vadd.f32 %v350, %v363
    %v365 = vpop.f32.mrf.mxu0
    %366 = vdwg.mxu0
    %367 = vmatpush.bf16.msra.mxu0 %v347
    %368 = vmatpush.bf16.msra.mxu0 %v345
    %369 = vmatpush.bf16.msra.mxu0 %v343
    %370 = vmatpush.bf16.msra.mxu0 %v341
    %371 = vmatpush.bf16.msra.mxu0 %v339
    %372 = vmatpush.bf16.msra.mxu0 %v337
    %373 = vmatpush.bf16.msra.mxu0 %v335
    %374 = vmatpush.bf16.msra.mxu0 %v333
    %375 = vmatmul.bf16.gmra.mxu0 %v249
    %v376 = vpop.f32.mrf.mxu0
    %v377 = vadd.f32 %v364, %v376
    %v378 = vpop.f32.mrf.mxu0
    %379 = vdwg.mxu0
    %380 = vmatpush.bf16.msra.mxu0 %v332
    %381 = vmatpush.bf16.msra.mxu0 %v330
    %382 = vmatpush.bf16.msra.mxu0 %v328
    %383 = vmatpush.bf16.msra.mxu0 %v326
    %384 = vmatpush.bf16.msra.mxu0 %v324
    %385 = vmatpush.bf16.msra.mxu0 %v322
    %386 = vmatpush.bf16.msra.mxu0 %v320
    %387 = vmatpush.bf16.msra.mxu0 %v318
    %388 = vmatmul.bf16.gmra.mxu0 %v248
    %v389 = vpop.f32.mrf.mxu0
    %v390 = vadd.f32 %v351, %v389
    %v391 = vpop.f32.mrf.mxu0
    %392 = vdwg.mxu0
    %393 = vmatpush.bf16.msra.mxu0 %v348
    %394 = vmatpush.bf16.msra.mxu0 %v346
    %395 = vmatpush.bf16.msra.mxu0 %v344
    %396 = vmatpush.bf16.msra.mxu0 %v342
    %397 = vmatpush.bf16.msra.mxu0 %v340
    %398 = vmatpush.bf16.msra.mxu0 %v338
    %399 = vmatpush.bf16.msra.mxu0 %v336
    %400 = vmatpush.bf16.msra.mxu0 %v334
    %401 = vmatmul.bf16.gmra.mxu0 %v249
    %v402 = vpop.f32.mrf.mxu0
    %v403 = vadd.f32 %v390, %v402
    %v404 = vpop.f32.mrf.mxu0
    %405 = vdwg.mxu0
    %v406 = vtanh.pop %v377
    %v407 = vtanh.pop %v403
    %v408 = vpack.c.bf16 %v406, %v406
    %v409 = vpack.c.bf16 %v407, %v407
    %s410 = scalar_lea.vmem [#allocation5], 5
    %v411 = vld [vmem:[%s410] ss:$8 sm:$0x3]
    %s412 = scalar_lea.vmem [#allocation2], 1024
    %v413 = vld [vmem:[%s412] sm:$0xff]
    %v414 = vld [vmem:[%s412 + $0x8] sm:$0xff]
    %v415 = vld [vmem:[%s412 + $0x10] sm:$0xff]
    %v416 = vld [vmem:[%s412 + $0x18] sm:$0xff]
    %v417 = vld [vmem:[%s412 + $0x20] sm:$0xff]
    %v418 = vld [vmem:[%s412 + $0x28] sm:$0xff]
    %v419 = vld [vmem:[%s412 + $0x30] sm:$0xff]
    %v420 = vld [vmem:[%s412 + $0x38] sm:$0xff]
    %v421 = vld [vmem:[%s412 + $0x40] sm:$0xff]
    %v422 = vld [vmem:[%s412 + $0x48] sm:$0xff]
    %v423 = vld [vmem:[%s412 + $0x50] sm:$0xff]
    %v424 = vld [vmem:[%s412 + $0x58] sm:$0xff]
    %v425 = vld [vmem:[%s412 + $0x60] sm:$0xff]
    %v426 = vld [vmem:[%s412 + $0x68] sm:$0xff]
    %v427 = vld [vmem:[%s412 + $0x70] sm:$0xff]
    %v428 = vld [vmem:[%s412 + $0x78] sm:$0xff]
    %v429 = vld [vmem:[%s412 + $0x80] sm:$0xff]
    %v430 = vld [vmem:[%s412 + $0x88] sm:$0xff]
    %v431 = vld [vmem:[%s412 + $0x90] sm:$0xff]
    %v432 = vld [vmem:[%s412 + $0x98] sm:$0xff]
    %v433 = vld [vmem:[%s412 + $0xa0] sm:$0xff]
    %v434 = vld [vmem:[%s412 + $0xa8] sm:$0xff]
    %v435 = vld [vmem:[%s412 + $0xb0] sm:$0xff]
    %v436 = vld [vmem:[%s412 + $0xb8] sm:$0xff]
    %v437 = vld [vmem:[%s412 + $0xc0] sm:$0xff]
    %v438 = vld [vmem:[%s412 + $0xc8] sm:$0xff]
    %v439 = vld [vmem:[%s412 + $0xd0] sm:$0xff]
    %v440 = vld [vmem:[%s412 + $0xd8] sm:$0xff]
    %v441 = vld [vmem:[%s412 + $0xe0] sm:$0xff]
    %v442 = vld [vmem:[%s412 + $0xe8] sm:$0xff]
    %v443 = vld [vmem:[%s412 + $0xf0] sm:$0xff]
    %v444 = vld [vmem:[%s412 + $0xf8] sm:$0xff]
    %v445 = vld [vmem:[%s412 + $0x100] sm:$0xff]
    %v446 = vld [vmem:[%s412 + $0x108] sm:$0xff]
    %v447 = vld [vmem:[%s412 + $0x110] sm:$0xff]
    %v448 = vld [vmem:[%s412 + $0x118] sm:$0xff]
    %v449 = vld [vmem:[%s412 + $0x120] sm:$0xff]
    %v450 = vld [vmem:[%s412 + $0x128] sm:$0xff]
    %v451 = vld [vmem:[%s412 + $0x130] sm:$0xff]
    %v452 = vld [vmem:[%s412 + $0x138] sm:$0xff]
    %v453 = vld [vmem:[%s412 + $0x140] sm:$0xff]
    %v454 = vld [vmem:[%s412 + $0x148] sm:$0xff]
    %v455 = vld [vmem:[%s412 + $0x150] sm:$0xff]
    %v456 = vld [vmem:[%s412 + $0x158] sm:$0xff]
    %v457 = vld [vmem:[%s412 + $0x160] sm:$0xff]
    %v458 = vld [vmem:[%s412 + $0x168] sm:$0xff]
    %v459 = vld [vmem:[%s412 + $0x170] sm:$0xff]
    %v460 = vld [vmem:[%s412 + $0x178] sm:$0xff]
    %v461 = vld [vmem:[%s412 + $0x180] sm:$0xff]
    %v462 = vld [vmem:[%s412 + $0x188] sm:$0xff]
    %v463 = vld [vmem:[%s412 + $0x190] sm:$0xff]
    %v464 = vld [vmem:[%s412 + $0x198] sm:$0xff]
    %v465 = vld [vmem:[%s412 + $0x1a0] sm:$0xff]
    %v466 = vld [vmem:[%s412 + $0x1a8] sm:$0xff]
    %v467 = vld [vmem:[%s412 + $0x1b0] sm:$0xff]
    %v468 = vld [vmem:[%s412 + $0x1b8] sm:$0xff]
    %v469 = vld [vmem:[%s412 + $0x1c0] sm:$0xff]
    %v470 = vld [vmem:[%s412 + $0x1c8] sm:$0xff]
    %v471 = vld [vmem:[%s412 + $0x1d0] sm:$0xff]
    %v472 = vld [vmem:[%s412 + $0x1d8] sm:$0xff]
    %v473 = vld [vmem:[%s412 + $0x1e0] sm:$0xff]
    %v474 = vld [vmem:[%s412 + $0x1e8] sm:$0xff]
    %v475 = vld [vmem:[%s412 + $0x1f0] sm:$0xff]
    %v476 = vld [vmem:[%s412 + $0x1f8] sm:$0xff]
    %v477 = vpack.c.bf16 %v415, %v413
    %v478 = vpack.c.bf16 %v416, %v414
    %v479 = vpack.c.bf16 %v419, %v417
    %v480 = vpack.c.bf16 %v420, %v418
    %v481 = vpack.c.bf16 %v423, %v421
    %v482 = vpack.c.bf16 %v424, %v422
    %v483 = vpack.c.bf16 %v427, %v425
    %v484 = vpack.c.bf16 %v428, %v426
    %v485 = vpack.c.bf16 %v431, %v429
    %v486 = vpack.c.bf16 %v432, %v430
    %v487 = vpack.c.bf16 %v435, %v433
    %v488 = vpack.c.bf16 %v436, %v434
    %v489 = vpack.c.bf16 %v439, %v437
    %v490 = vpack.c.bf16 %v440, %v438
    %v491 = vpack.c.bf16 %v443, %v441
    %v492 = vpack.c.bf16 %v444, %v442
    %v493 = vpack.c.bf16 %v447, %v445
    %v494 = vpack.c.bf16 %v448, %v446
    %v495 = vpack.c.bf16 %v451, %v449
    %v496 = vpack.c.bf16 %v452, %v450
    %v497 = vpack.c.bf16 %v455, %v453
    %v498 = vpack.c.bf16 %v456, %v454
    %v499 = vpack.c.bf16 %v459, %v457
    %v500 = vpack.c.bf16 %v460, %v458
    %v501 = vpack.c.bf16 %v463, %v461
    %v502 = vpack.c.bf16 %v464, %v462
    %v503 = vpack.c.bf16 %v467, %v465
    %v504 = vpack.c.bf16 %v468, %v466
    %v505 = vpack.c.bf16 %v471, %v469
    %v506 = vpack.c.bf16 %v472, %v470
    %v507 = vpack.c.bf16 %v475, %v473
    %v508 = vpack.c.bf16 %v476, %v474
    %v510 = vperm.slane %v411, 0
    %v511 = vperm.slane %v411, 1
    %514 = vmatpush.bf16.msra.mxu0 %v491
    %515 = vmatpush.bf16.msra.mxu0 %v489
    %516 = vmatpush.bf16.msra.mxu0 %v487
    %517 = vmatpush.bf16.msra.mxu0 %v485
    %518 = vmatpush.bf16.msra.mxu0 %v483
    %519 = vmatpush.bf16.msra.mxu0 %v481
    %520 = vmatpush.bf16.msra.mxu0 %v479
    %521 = vmatpush.bf16.msra.mxu0 %v477
    %522 = vmatmul.bf16.gmra.mxu0 %v408
    %v523 = vpop.f32.mrf.mxu0
    %v524 = vadd.f32 %v510, %v523
    %v525 = vpop.f32.mrf.mxu0
    %526 = vdwg.mxu0
    %527 = vmatpush.bf16.msra.mxu0 %v507
    %528 = vmatpush.bf16.msra.mxu0 %v505
    %529 = vmatpush.bf16.msra.mxu0 %v503
    %530 = vmatpush.bf16.msra.mxu0 %v501
    %531 = vmatpush.bf16.msra.mxu0 %v499
    %532 = vmatpush.bf16.msra.mxu0 %v497
    %533 = vmatpush.bf16.msra.mxu0 %v495
    %534 = vmatpush.bf16.msra.mxu0 %v493
    %535 = vmatmul.bf16.gmra.mxu0 %v409
    %v536 = vpop.f32.mrf.mxu0
    %v537 = vadd.f32 %v524, %v536
    %v538 = vpop.f32.mrf.mxu0
    %539 = vdwg.mxu0
    %540 = vmatpush.bf16.msra.mxu0 %v492
    %541 = vmatpush.bf16.msra.mxu0 %v490
    %542 = vmatpush.bf16.msra.mxu0 %v488
    %543 = vmatpush.bf16.msra.mxu0 %v486
    %544 = vmatpush.bf16.msra.mxu0 %v484
    %545 = vmatpush.bf16.msra.mxu0 %v482
    %546 = vmatpush.bf16.msra.mxu0 %v480
    %547 = vmatpush.bf16.msra.mxu0 %v478
    %548 = vmatmul.bf16.gmra.mxu0 %v408
    %v549 = vpop.f32.mrf.mxu0
    %v550 = vadd.f32 %v511, %v549
    %v551 = vpop.f32.mrf.mxu0
    %552 = vdwg.mxu0
    %553 = vmatpush.bf16.msra.mxu0 %v508
    %554 = vmatpush.bf16.msra.mxu0 %v506
    %555 = vmatpush.bf16.msra.mxu0 %v504
    %556 = vmatpush.bf16.msra.mxu0 %v502
    %557 = vmatpush.bf16.msra.mxu0 %v500
    %558 = vmatpush.bf16.msra.mxu0 %v498
    %559 = vmatpush.bf16.msra.mxu0 %v496
    %560 = vmatpush.bf16.msra.mxu0 %v494
    %561 = vmatmul.bf16.gmra.mxu0 %v409
    %v562 = vpop.f32.mrf.mxu0
    %v563 = vadd.f32 %v550, %v562
    %v564 = vpop.f32.mrf.mxu0
    %565 = vdwg.mxu0
    %v566 = vtanh.pop %v537
    %v567 = vtanh.pop %v563
    %v568 = vpack.c.bf16 %v566, %v566
    %v569 = vpack.c.bf16 %v567, %v567
    %s570 = scalar_lea.vmem [#allocation5], 6
    %v571 = vld [vmem:[%s570] ss:$8 sm:$0x3]
    %s572 = scalar_lea.vmem [#allocation2], 1536
    %v573 = vld [vmem:[%s572] sm:$0xff]
    %v574 = vld [vmem:[%s572 + $0x8] sm:$0xff]
    %v575 = vld [vmem:[%s572 + $0x10] sm:$0xff]
    %v576 = vld [vmem:[%s572 + $0x18] sm:$0xff]
    %v577 = vld [vmem:[%s572 + $0x20] sm:$0xff]
    %v578 = vld [vmem:[%s572 + $0x28] sm:$0xff]
    %v579 = vld [vmem:[%s572 + $0x30] sm:$0xff]
    %v580 = vld [vmem:[%s572 + $0x38] sm:$0xff]
    %v581 = vld [vmem:[%s572 + $0x40] sm:$0xff]
    %v582 = vld [vmem:[%s572 + $0x48] sm:$0xff]
    %v583 = vld [vmem:[%s572 + $0x50] sm:$0xff]
    %v584 = vld [vmem:[%s572 + $0x58] sm:$0xff]
    %v585 = vld [vmem:[%s572 + $0x60] sm:$0xff]
    %v586 = vld [vmem:[%s572 + $0x68] sm:$0xff]
    %v587 = vld [vmem:[%s572 + $0x70] sm:$0xff]
    %v588 = vld [vmem:[%s572 + $0x78] sm:$0xff]
    %v589 = vld [vmem:[%s572 + $0x80] sm:$0xff]
    %v590 = vld [vmem:[%s572 + $0x88] sm:$0xff]
    %v591 = vld [vmem:[%s572 + $0x90] sm:$0xff]
    %v592 = vld [vmem:[%s572 + $0x98] sm:$0xff]
    %v593 = vld [vmem:[%s572 + $0xa0] sm:$0xff]
    %v594 = vld [vmem:[%s572 + $0xa8] sm:$0xff]
    %v595 = vld [vmem:[%s572 + $0xb0] sm:$0xff]
    %v596 = vld [vmem:[%s572 + $0xb8] sm:$0xff]
    %v597 = vld [vmem:[%s572 + $0xc0] sm:$0xff]
    %v598 = vld [vmem:[%s572 + $0xc8] sm:$0xff]
    %v599 = vld [vmem:[%s572 + $0xd0] sm:$0xff]
    %v600 = vld [vmem:[%s572 + $0xd8] sm:$0xff]
    %v601 = vld [vmem:[%s572 + $0xe0] sm:$0xff]
    %v602 = vld [vmem:[%s572 + $0xe8] sm:$0xff]
    %v603 = vld [vmem:[%s572 + $0xf0] sm:$0xff]
    %v604 = vld [vmem:[%s572 + $0xf8] sm:$0xff]
    %v605 = vld [vmem:[%s572 + $0x100] sm:$0xff]
    %v606 = vld [vmem:[%s572 + $0x108] sm:$0xff]
    %v607 = vld [vmem:[%s572 + $0x110] sm:$0xff]
    %v608 = vld [vmem:[%s572 + $0x118] sm:$0xff]
    %v609 = vld [vmem:[%s572 + $0x120] sm:$0xff]
    %v610 = vld [vmem:[%s572 + $0x128] sm:$0xff]
    %v611 = vld [vmem:[%s572 + $0x130] sm:$0xff]
    %v612 = vld [vmem:[%s572 + $0x138] sm:$0xff]
    %v613 = vld [vmem:[%s572 + $0x140] sm:$0xff]
    %v614 = vld [vmem:[%s572 + $0x148] sm:$0xff]
    %v615 = vld [vmem:[%s572 + $0x150] sm:$0xff]
    %v616 = vld [vmem:[%s572 + $0x158] sm:$0xff]
    %v617 = vld [vmem:[%s572 + $0x160] sm:$0xff]
    %v618 = vld [vmem:[%s572 + $0x168] sm:$0xff]
    %v619 = vld [vmem:[%s572 + $0x170] sm:$0xff]
    %v620 = vld [vmem:[%s572 + $0x178] sm:$0xff]
    %v621 = vld [vmem:[%s572 + $0x180] sm:$0xff]
    %v622 = vld [vmem:[%s572 + $0x188] sm:$0xff]
    %v623 = vld [vmem:[%s572 + $0x190] sm:$0xff]
    %v624 = vld [vmem:[%s572 + $0x198] sm:$0xff]
    %v625 = vld [vmem:[%s572 + $0x1a0] sm:$0xff]
    %v626 = vld [vmem:[%s572 + $0x1a8] sm:$0xff]
    %v627 = vld [vmem:[%s572 + $0x1b0] sm:$0xff]
    %v628 = vld [vmem:[%s572 + $0x1b8] sm:$0xff]
    %v629 = vld [vmem:[%s572 + $0x1c0] sm:$0xff]
    %v630 = vld [vmem:[%s572 + $0x1c8] sm:$0xff]
    %v631 = vld [vmem:[%s572 + $0x1d0] sm:$0xff]
    %v632 = vld [vmem:[%s572 + $0x1d8] sm:$0xff]
    %v633 = vld [vmem:[%s572 + $0x1e0] sm:$0xff]
    %v634 = vld [vmem:[%s572 + $0x1e8] sm:$0xff]
    %v635 = vld [vmem:[%s572 + $0x1f0] sm:$0xff]
    %v636 = vld [vmem:[%s572 + $0x1f8] sm:$0xff]
    %v637 = vpack.c.bf16 %v575, %v573
    %v638 = vpack.c.bf16 %v576, %v574
    %v639 = vpack.c.bf16 %v579, %v577
    %v640 = vpack.c.bf16 %v580, %v578
    %v641 = vpack.c.bf16 %v583, %v581
    %v642 = vpack.c.bf16 %v584, %v582
    %v643 = vpack.c.bf16 %v587, %v585
    %v644 = vpack.c.bf16 %v588, %v586
    %v645 = vpack.c.bf16 %v591, %v589
    %v646 = vpack.c.bf16 %v592, %v590
    %v647 = vpack.c.bf16 %v595, %v593
    %v648 = vpack.c.bf16 %v596, %v594
    %v649 = vpack.c.bf16 %v599, %v597
    %v650 = vpack.c.bf16 %v600, %v598
    %v651 = vpack.c.bf16 %v603, %v601
    %v652 = vpack.c.bf16 %v604, %v602
    %v653 = vpack.c.bf16 %v607, %v605
    %v654 = vpack.c.bf16 %v608, %v606
    %v655 = vpack.c.bf16 %v611, %v609
    %v656 = vpack.c.bf16 %v612, %v610
    %v657 = vpack.c.bf16 %v615, %v613
    %v658 = vpack.c.bf16 %v616, %v614
    %v659 = vpack.c.bf16 %v619, %v617
    %v660 = vpack.c.bf16 %v620, %v618
    %v661 = vpack.c.bf16 %v623, %v621
    %v662 = vpack.c.bf16 %v624, %v622
    %v663 = vpack.c.bf16 %v627, %v625
    %v664 = vpack.c.bf16 %v628, %v626
    %v665 = vpack.c.bf16 %v631, %v629
    %v666 = vpack.c.bf16 %v632, %v630
    %v667 = vpack.c.bf16 %v635, %v633
    %v668 = vpack.c.bf16 %v636, %v634
    %v670 = vperm.slane %v571, 0
    %v671 = vperm.slane %v571, 1
    %674 = vmatpush.bf16.msra.mxu0 %v651
    %675 = vmatpush.bf16.msra.mxu0 %v649
    %676 = vmatpush.bf16.msra.mxu0 %v647
    %677 = vmatpush.bf16.msra.mxu0 %v645
    %678 = vmatpush.bf16.msra.mxu0 %v643
    %679 = vmatpush.bf16.msra.mxu0 %v641
    %680 = vmatpush.bf16.msra.mxu0 %v639
    %681 = vmatpush.bf16.msra.mxu0 %v637
    %682 = vmatmul.bf16.gmra.mxu0 %v568
    %v683 = vpop.f32.mrf.mxu0
    %v684 = vadd.f32 %v670, %v683
    %v685 = vpop.f32.mrf.mxu0
    %686 = vdwg.mxu0
    %687 = vmatpush.bf16.msra.mxu0 %v667
    %688 = vmatpush.bf16.msra.mxu0 %v665
    %689 = vmatpush.bf16.msra.mxu0 %v663
    %690 = vmatpush.bf16.msra.mxu0 %v661
    %691 = vmatpush.bf16.msra.mxu0 %v659
    %692 = vmatpush.bf16.msra.mxu0 %v657
    %693 = vmatpush.bf16.msra.mxu0 %v655
    %694 = vmatpush.bf16.msra.mxu0 %v653
    %695 = vmatmul.bf16.gmra.mxu0 %v569
    %v696 = vpop.f32.mrf.mxu0
    %v697 = vadd.f32 %v684, %v696
    %v698 = vpop.f32.mrf.mxu0
    %699 = vdwg.mxu0
    %700 = vmatpush.bf16.msra.mxu0 %v652
    %701 = vmatpush.bf16.msra.mxu0 %v650
    %702 = vmatpush.bf16.msra.mxu0 %v648
    %703 = vmatpush.bf16.msra.mxu0 %v646
    %704 = vmatpush.bf16.msra.mxu0 %v644
    %705 = vmatpush.bf16.msra.mxu0 %v642
    %706 = vmatpush.bf16.msra.mxu0 %v640
    %707 = vmatpush.bf16.msra.mxu0 %v638
    %708 = vmatmul.bf16.gmra.mxu0 %v568
    %v709 = vpop.f32.mrf.mxu0
    %v710 = vadd.f32 %v671, %v709
    %v711 = vpop.f32.mrf.mxu0
    %712 = vdwg.mxu0
    %713 = vmatpush.bf16.msra.mxu0 %v668
    %714 = vmatpush.bf16.msra.mxu0 %v666
    %715 = vmatpush.bf16.msra.mxu0 %v664
    %716 = vmatpush.bf16.msra.mxu0 %v662
    %717 = vmatpush.bf16.msra.mxu0 %v660
    %718 = vmatpush.bf16.msra.mxu0 %v658
    %719 = vmatpush.bf16.msra.mxu0 %v656
    %720 = vmatpush.bf16.msra.mxu0 %v654
    %721 = vmatmul.bf16.gmra.mxu0 %v569
    %v722 = vpop.f32.mrf.mxu0
    %v723 = vadd.f32 %v710, %v722
    %v724 = vpop.f32.mrf.mxu0
    %725 = vdwg.mxu0
    %v726 = vtanh.pop %v697
    %v727 = vtanh.pop %v723
    %v728 = vpack.c.bf16 %v726, %v726
    %v729 = vpack.c.bf16 %v727, %v727
    %s730 = scalar_lea.vmem [#allocation5], 7
    %v731 = vld [vmem:[%s730] ss:$8 sm:$0x3]
    %s732 = scalar_lea.vmem [#allocation2], 2048
    %v733 = vld [vmem:[%s732] sm:$0xff]
    %v734 = vld [vmem:[%s732 + $0x8] sm:$0xff]
    %v735 = vld [vmem:[%s732 + $0x10] sm:$0xff]
    %v736 = vld [vmem:[%s732 + $0x18] sm:$0xff]
    %v737 = vld [vmem:[%s732 + $0x20] sm:$0xff]
    %v738 = vld [vmem:[%s732 + $0x28] sm:$0xff]
    %v739 = vld [vmem:[%s732 + $0x30] sm:$0xff]
    %v740 = vld [vmem:[%s732 + $0x38] sm:$0xff]
    %v741 = vld [vmem:[%s732 + $0x40] sm:$0xff]
    %v742 = vld [vmem:[%s732 + $0x48] sm:$0xff]
    %v743 = vld [vmem:[%s732 + $0x50] sm:$0xff]
    %v744 = vld [vmem:[%s732 + $0x58] sm:$0xff]
    %v745 = vld [vmem:[%s732 + $0x60] sm:$0xff]
    %v746 = vld [vmem:[%s732 + $0x68] sm:$0xff]
    %v747 = vld [vmem:[%s732 + $0x70] sm:$0xff]
    %v748 = vld [vmem:[%s732 + $0x78] sm:$0xff]
    %v749 = vld [vmem:[%s732 + $0x80] sm:$0xff]
    %v750 = vld [vmem:[%s732 + $0x88] sm:$0xff]
    %v751 = vld [vmem:[%s732 + $0x90] sm:$0xff]
    %v752 = vld [vmem:[%s732 + $0x98] sm:$0xff]
    %v753 = vld [vmem:[%s732 + $0xa0] sm:$0xff]
    %v754 = vld [vmem:[%s732 + $0xa8] sm:$0xff]
    %v755 = vld [vmem:[%s732 + $0xb0] sm:$0xff]
    %v756 = vld [vmem:[%s732 + $0xb8] sm:$0xff]
    %v757 = vld [vmem:[%s732 + $0xc0] sm:$0xff]
    %v758 = vld [vmem:[%s732 + $0xc8] sm:$0xff]
    %v759 = vld [vmem:[%s732 + $0xd0] sm:$0xff]
    %v760 = vld [vmem:[%s732 + $0xd8] sm:$0xff]
    %v761 = vld [vmem:[%s732 + $0xe0] sm:$0xff]
    %v762 = vld [vmem:[%s732 + $0xe8] sm:$0xff]
    %v763 = vld [vmem:[%s732 + $0xf0] sm:$0xff]
    %v764 = vld [vmem:[%s732 + $0xf8] sm:$0xff]
    %v765 = vld [vmem:[%s732 + $0x100] sm:$0xff]
    %v766 = vld [vmem:[%s732 + $0x108] sm:$0xff]
    %v767 = vld [vmem:[%s732 + $0x110] sm:$0xff]
    %v768 = vld [vmem:[%s732 + $0x118] sm:$0xff]
    %v769 = vld [vmem:[%s732 + $0x120] sm:$0xff]
    %v770 = vld [vmem:[%s732 + $0x128] sm:$0xff]
    %v771 = vld [vmem:[%s732 + $0x130] sm:$0xff]
    %v772 = vld [vmem:[%s732 + $0x138] sm:$0xff]
    %v773 = vld [vmem:[%s732 + $0x140] sm:$0xff]
    %v774 = vld [vmem:[%s732 + $0x148] sm:$0xff]
    %v775 = vld [vmem:[%s732 + $0x150] sm:$0xff]
    %v776 = vld [vmem:[%s732 + $0x158] sm:$0xff]
    %v777 = vld [vmem:[%s732 + $0x160] sm:$0xff]
    %v778 = vld [vmem:[%s732 + $0x168] sm:$0xff]
    %v779 = vld [vmem:[%s732 + $0x170] sm:$0xff]
    %v780 = vld [vmem:[%s732 + $0x178] sm:$0xff]
    %v781 = vld [vmem:[%s732 + $0x180] sm:$0xff]
    %v782 = vld [vmem:[%s732 + $0x188] sm:$0xff]
    %v783 = vld [vmem:[%s732 + $0x190] sm:$0xff]
    %v784 = vld [vmem:[%s732 + $0x198] sm:$0xff]
    %v785 = vld [vmem:[%s732 + $0x1a0] sm:$0xff]
    %v786 = vld [vmem:[%s732 + $0x1a8] sm:$0xff]
    %v787 = vld [vmem:[%s732 + $0x1b0] sm:$0xff]
    %v788 = vld [vmem:[%s732 + $0x1b8] sm:$0xff]
    %v789 = vld [vmem:[%s732 + $0x1c0] sm:$0xff]
    %v790 = vld [vmem:[%s732 + $0x1c8] sm:$0xff]
    %v791 = vld [vmem:[%s732 + $0x1d0] sm:$0xff]
    %v792 = vld [vmem:[%s732 + $0x1d8] sm:$0xff]
    %v793 = vld [vmem:[%s732 + $0x1e0] sm:$0xff]
    %v794 = vld [vmem:[%s732 + $0x1e8] sm:$0xff]
    %v795 = vld [vmem:[%s732 + $0x1f0] sm:$0xff]
    %v796 = vld [vmem:[%s732 + $0x1f8] sm:$0xff]
    %v797 = vpack.c.bf16 %v735, %v733
    %v798 = vpack.c.bf16 %v736, %v734
    %v799 = vpack.c.bf16 %v739, %v737
    %v800 = vpack.c.bf16 %v740, %v738
    %v801 = vpack.c.bf16 %v743, %v741
    %v802 = vpack.c.bf16 %v744, %v742
    %v803 = vpack.c.bf16 %v747, %v745
    %v804 = vpack.c.bf16 %v748, %v746
    %v805 = vpack.c.bf16 %v751, %v749
    %v806 = vpack.c.bf16 %v752, %v750
    %v807 = vpack.c.bf16 %v755, %v753
    %v808 = vpack.c.bf16 %v756, %v754
    %v809 = vpack.c.bf16 %v759, %v757
    %v810 = vpack.c.bf16 %v760, %v758
    %v811 = vpack.c.bf16 %v763, %v761
    %v812 = vpack.c.bf16 %v764, %v762
    %v813 = vpack.c.bf16 %v767, %v765
    %v814 = vpack.c.bf16 %v768, %v766
    %v815 = vpack.c.bf16 %v771, %v769
    %v816 = vpack.c.bf16 %v772, %v770
    %v817 = vpack.c.bf16 %v775, %v773
    %v818 = vpack.c.bf16 %v776, %v774
    %v819 = vpack.c.bf16 %v779, %v777
    %v820 = vpack.c.bf16 %v780, %v778
    %v821 = vpack.c.bf16 %v783, %v781
    %v822 = vpack.c.bf16 %v784, %v782
    %v823 = vpack.c.bf16 %v787, %v785
    %v824 = vpack.c.bf16 %v788, %v786
    %v825 = vpack.c.bf16 %v791, %v789
    %v826 = vpack.c.bf16 %v792, %v790
    %v827 = vpack.c.bf16 %v795, %v793
    %v828 = vpack.c.bf16 %v796, %v794
    %v830 = vperm.slane %v731, 0
    %v831 = vperm.slane %v731, 1
    %834 = vmatpush.bf16.msra.mxu0 %v811
    %835 = vmatpush.bf16.msra.mxu0 %v809
    %836 = vmatpush.bf16.msra.mxu0 %v807
    %837 = vmatpush.bf16.msra.mxu0 %v805
    %838 = vmatpush.bf16.msra.mxu0 %v803
    %839 = vmatpush.bf16.msra.mxu0 %v801
    %840 = vmatpush.bf16.msra.mxu0 %v799
    %841 = vmatpush.bf16.msra.mxu0 %v797
    %842 = vmatmul.bf16.gmra.mxu0 %v728
    %v843 = vpop.f32.mrf.mxu0
    %v844 = vadd.f32 %v830, %v843
    %v845 = vpop.f32.mrf.mxu0
    %846 = vdwg.mxu0
    %847 = vmatpush.bf16.msra.mxu0 %v827
    %848 = vmatpush.bf16.msra.mxu0 %v825
    %849 = vmatpush.bf16.msra.mxu0 %v823
    %850 = vmatpush.bf16.msra.mxu0 %v821
    %851 = vmatpush.bf16.msra.mxu0 %v819
    %852 = vmatpush.bf16.msra.mxu0 %v817
    %853 = vmatpush.bf16.msra.mxu0 %v815
    %854 = vmatpush.bf16.msra.mxu0 %v813
    %855 = vmatmul.bf16.gmra.mxu0 %v729
    %v856 = vpop.f32.mrf.mxu0
    %v857 = vadd.f32 %v844, %v856
    %v858 = vpop.f32.mrf.mxu0
    %859 = vdwg.mxu0
    %860 = vmatpush.bf16.msra.mxu0 %v812
    %861 = vmatpush.bf16.msra.mxu0 %v810
    %862 = vmatpush.bf16.msra.mxu0 %v808
    %863 = vmatpush.bf16.msra.mxu0 %v806
    %864 = vmatpush.bf16.msra.mxu0 %v804
    %865 = vmatpush.bf16.msra.mxu0 %v802
    %866 = vmatpush.bf16.msra.mxu0 %v800
    %867 = vmatpush.bf16.msra.mxu0 %v798
    %868 = vmatmul.bf16.gmra.mxu0 %v728
    %v869 = vpop.f32.mrf.mxu0
    %v870 = vadd.f32 %v831, %v869
    %v871 = vpop.f32.mrf.mxu0
    %872 = vdwg.mxu0
    %873 = vmatpush.bf16.msra.mxu0 %v828
    %874 = vmatpush.bf16.msra.mxu0 %v826
    %875 = vmatpush.bf16.msra.mxu0 %v824
    %876 = vmatpush.bf16.msra.mxu0 %v822
    %877 = vmatpush.bf16.msra.mxu0 %v820
    %878 = vmatpush.bf16.msra.mxu0 %v818
    %879 = vmatpush.bf16.msra.mxu0 %v816
    %880 = vmatpush.bf16.msra.mxu0 %v814
    %881 = vmatmul.bf16.gmra.mxu0 %v729
    %v882 = vpop.f32.mrf.mxu0
    %v883 = vadd.f32 %v870, %v882
    %v884 = vpop.f32.mrf.mxu0
    %885 = vdwg.mxu0
    %886 = vst [vmem:[#allocation7] sm:$0xff] %v857
    %887 = vst [vmem:[#allocation7 + $0x8] sm:$0xff] %v883
    %s888 = scalar_lea.vmem [#allocation5], 16
    %v889 = vld [vmem:[%s888] ss:$8 sm:$0x3]
    %v890 = vld [vmem:[#allocation5 + $0x11] ss:$0 sm:$0xff]
    %v891 = vtanh.pop %v857
    %v892 = vtanh.pop %v883
    %v894 = vperm.slane %v889, 0
    %v895 = vperm.slane %v889, 1
    %v898 = vmul.f32 %v891, %v894
    %v899 = vmul.f32 %v892, %v895
    %v900 = vadd.f32 %v898, %v899
    %901 = vadd.xlane.f32.xlu0 %v900
    %v902 = vpop.xlane.xlu0 %901
    %v903 = vadd.f32 %v902, %v890
    %vm904 = vcmask 7168
    %905 = vst.msk [vmem:[%s4] sm:$0xff] %vm904, %v903
    // Predicated region
    $region22: #{tpu_custom_call.1} parent=1 // pred_check
      _
    $region23: #{tpu_custom_call.1} parent=1 // pred_check_branch
      %907 = sbr.rel (0) target = $region25
    $region24: #{tpu_custom_call.1} parent=1 // pred_region
      %909 = vsyncadd [#allocation4], 0
      %s911 = sshll.u32 [#allocation7], 4
      %s912 = int_to_ptr.vmem [resolvable:$true] %s911
      %s913 = sshll.u32 %s3, 4
      %s914 = int_to_ptr.hbm [resolvable:$true] %s913
      %916 = dma.vmem_to_hbm [thread:$0]  %s912, 256, %s914, [#allocation4]
    $region25: #{tpu_custom_call.1} parent=1 // pred_fallthru
      _
    // Predicated region
    $region26: #{tpu_custom_call.1} parent=1 // pred_check
      _
    $region27: #{tpu_custom_call.1} parent=1 // pred_check_branch
      %918 = sbr.rel (0) target = $region29
    $region28: #{tpu_custom_call.1} parent=1 // pred_region
      _
    $region29: #{tpu_custom_call.1} parent=1 // pred_fallthru
      _
    // Predicated region
    $region30: #{tpu_custom_call.1} parent=1 // pred_check
      _
    $region31: #{tpu_custom_call.1} parent=1 // pred_check_branch
      %920 = sbr.rel (0) target = $region33
    $region32: #{tpu_custom_call.1} parent=1 // pred_region
      %922 = dma.done [#allocation4], 256
    $region33: #{tpu_custom_call.1} parent=1 // pred_fallthru
      _
    // Predicated region
    $region34: #{tpu_custom_call.1} parent=1 // pred_check
      _
    $region35: #{tpu_custom_call.1} parent=1 // pred_check_branch
      %924 = sbr.rel (0) target = $region37
    $region36: #{tpu_custom_call.1} parent=1 // pred_region
      _
    $region37: #{tpu_custom_call.1} parent=1 // pred_fallthru
      _
    %925 = vsyncpa [#allocation3], 1
    %926 = vsyncpa [#allocation6], 1
    %927 = vsyncpa [#allocation4], 1

</llo_original>
